<compile_context>
chip_gen: v7x
topology: tpu7x:2x2x1
jax: 0.10.0
libtpu: 0.0.40
codegen_flags: <defaults>
</compile_context>

<pallas_src>
import jax
import jax.numpy as jnp
from jax.experimental import pallas as pl
from jax.experimental.pallas import tpu as pltpu

IN_DIM = 2     # fc1 input features
HID = 5        # fc1 output / fc2 input features
OUT_DIM = 1    # fc2 output features

BP = 512       # batch tile (lane axis -> must be a multiple of 128)

# Flat SMEM parameter layout:
#   [0:10)   w1[j, k] at index 2*j + k        (fc1.weight, shape (5, 2))
#   [10:15)  b1[j]    at index 10 + j         (fc1.bias,   shape (5,))
#   [15:20)  w2[0, j] at index 15 + j         (fc2.weight, shape (1, 5))
#   [20]     b2[0]                            (fc2.bias,   shape (1,))
N_PARAMS = HID * IN_DIM + HID + HID * OUT_DIM + OUT_DIM   # 21


def mlp_kernel(params_ref, xt_ref, out_ref):
    # params_ref: (21,) f32 in SMEM — read element-wise as scalars.
    # xt_ref:     (IN_DIM, BP) f32 — input transposed, batch along lanes.
    # out_ref:    (1, BP) f32      — sigmoid(fc2(relu(fc1(x)))), batch along lanes.
    x0 = xt_ref[0:1, :]                       # (1, BP)
    x1 = xt_ref[1:2, :]                       # (1, BP)

    acc = jnp.zeros_like(x0)
    for j in range(HID):                      # tiny fixed loop, fully unrolled
        h = (x0 * params_ref[2 * j]
             + x1 * params_ref[2 * j + 1]
             + params_ref[10 + j])            # fc1 row j (VPU FMAs)
        h = jnp.maximum(h, 0.0)               # ReLU
        acc = acc + h * params_ref[15 + j]    # fc2 accumulation
    z = acc + params_ref[20]                  # fc2 bias

    out_ref[...] = 1.0 / (1.0 + jnp.exp(-z))  # sigmoid: exp on EUP, one vdiv


def prepare_params(params):
    """Flatten the 21 real parameter scalars ONCE into the SMEM layout."""
    w1, b1, w2, b2 = params
    return jnp.concatenate([
        w1.reshape(-1), b1.reshape(-1), w2.reshape(-1), b2.reshape(-1)
    ]).astype(jnp.float32)


def mlp_forward(x, params_flat):
    """x: (B, 2) float32. Returns (B, 1) = sigmoid(fc2(relu(fc1(x))))."""
    B = x.shape[0]
    n_tiles = pl.cdiv(B, BP)
    b_pad = n_tiles * BP

    # Transpose so batch runs along lanes; pad batch to a multiple of BP.
    # Padded columns are zero -> finite outputs, sliced away below.
    xt = jnp.zeros((IN_DIM, b_pad), jnp.float32).at[:, :B].set(
        x.astype(jnp.float32).T)

    out = pl.pallas_call(
        mlp_kernel,
        out_shape=jax.ShapeDtypeStruct((1, b_pad), jnp.float32),
        grid=(n_tiles,),
        in_specs=[
            # 21 scalars, whole array resident in SMEM (no VMEM double-buffer).
            pl.BlockSpec(memory_space=pltpu.MemorySpace.SMEM),
            # Input tile: (2, BP), batch along lanes.
            pl.BlockSpec((IN_DIM, BP), lambda i: (0, i)),
        ],
        # Output tile: (1, BP) — unmasked full-lane stores, minimal writeback.
        out_specs=pl.BlockSpec((1, BP), lambda i: (0, i)),
        compiler_params=pltpu.CompilerParams(
            dimension_semantics=("parallel",)),
    )(params_flat, xt)

    return out[0, :B].reshape(B, OUT_DIM)


def ref_forward(x, params):
    """Pure-JAX reference matching the PyTorch MLP semantics."""
    w1, b1, w2, b2 = params
    h = jnp.maximum(x @ w1.T + b1, 0.0)
    z = h @ w2.T + b2
    return 1.0 / (1.0 + jnp.exp(-z))


def init_params(key):
    # Matches nn.Linear default init: U(-1/sqrt(fan_in), 1/sqrt(fan_in)).
    ks = jax.random.split(key, 4)
    k1 = 1.0 / jnp.sqrt(jnp.float32(IN_DIM))
    k2 = 1.0 / jnp.sqrt(jnp.float32(HID))
    w1 = jax.random.uniform(ks[0], (HID, IN_DIM), jnp.float32, -k1, k1)  # fc1.weight
    b1 = jax.random.uniform(ks[1], (HID,), jnp.float32, -k1, k1)         # fc1.bias
    w2 = jax.random.uniform(ks[2], (OUT_DIM, HID), jnp.float32, -k2, k2) # fc2.weight
    b2 = jax.random.uniform(ks[3], (OUT_DIM,), jnp.float32, -k2, k2)     # fc2.bias
    return (w1, b1, w2, b2)


if __name__ == "__main__":
    key = jax.random.PRNGKey(0)
    pkey, xkey = jax.random.split(key)
    params = init_params(pkey)
    params_flat = prepare_params(params)   # built once, reused across calls

    # Small spec-consistent case (batch=2, features=2).
    B = 2
    x = jax.random.normal(xkey, (B, IN_DIM), jnp.float32)
    out = jax.block_until_ready(mlp_forward(x, params_flat))
    ref = ref_forward(x, params)
    assert out.shape == (B, OUT_DIM), out.shape
    assert jnp.allclose(out, ref, atol=2e-6, rtol=1e-5), (out, ref)

    # Multi-tile batch (3 grid steps, last tile partially padded) to exercise
    # the tiled path / megacore sharding.
    B2 = 1500
    x2 = jax.random.normal(jax.random.PRNGKey(1), (B2, IN_DIM), jnp.float32)
    out2 = jax.block_until_ready(mlp_forward(x2, params_flat))
    ref2 = ref_forward(x2, params)
    assert out2.shape == (B2, OUT_DIM), out2.shape
    assert jnp.allclose(out2, ref2, atol=2e-6, rtol=1e-5)

    print("KERNEL_OK")
</pallas_src>

<mosaic_0001>
module attributes {stable_mosaic.version = 11 : i64} {
  func.func @mlp_kernel(%arg0: i32, %arg1: memref<21xf32, #tpu.memory_space<smem>>, %arg2: memref<2x512xf32, #tpu.memory_space<vmem>>, %arg3: memref<1x512xf32, #tpu.memory_space<vmem>>) attributes {dimension_semantics = [#tpu.dimension_semantics<parallel>], iteration_bounds = array<i64: 1>, scalar_prefetch = 0 : i64, scratch_operands = 0 : i64, tpu.core_type = #tpu.core_type<tc>, window_params = [{transform_indices = @transform_0, window_bounds = array<i64: 21>}, {transform_indices = @transform_1, window_bounds = array<i64: 2, 512>}, {transform_indices = @transform_2, window_bounds = array<i64: 1, 512>}]} {
    %c0 = arith.constant 0 : index
    %c0_0 = arith.constant 0 : index
    %0 = vector.load %arg2[%c0, %c0_0] : memref<2x512xf32, #tpu.memory_space<vmem>>, vector<1x512xf32>
    %c1 = arith.constant 1 : index
    %c0_1 = arith.constant 0 : index
    %1 = vector.load %arg2[%c1, %c0_1] : memref<2x512xf32, #tpu.memory_space<vmem>>, vector<1x512xf32>
    %cst = arith.constant 0.000000e+00 : f32
    %2 = vector.broadcast %cst : f32 to vector<1x512xf32>
    %c0_2 = arith.constant 0 : index
    %3 = memref.load %arg1[%c0_2] : memref<21xf32, #tpu.memory_space<smem>>
    %4 = vector.broadcast %3 : f32 to vector<1x512xf32>
    %5 = arith.mulf %0, %4 : vector<1x512xf32>
    %c1_3 = arith.constant 1 : index
    %6 = memref.load %arg1[%c1_3] : memref<21xf32, #tpu.memory_space<smem>>
    %7 = vector.broadcast %6 : f32 to vector<1x512xf32>
    %8 = arith.mulf %1, %7 : vector<1x512xf32>
    %9 = arith.addf %5, %8 : vector<1x512xf32>
    %c10 = arith.constant 10 : index
    %10 = memref.load %arg1[%c10] : memref<21xf32, #tpu.memory_space<smem>>
    %11 = vector.broadcast %10 : f32 to vector<1x512xf32>
    %12 = arith.addf %9, %11 : vector<1x512xf32>
    %cst_4 = arith.constant 0.000000e+00 : f32
    %13 = vector.broadcast %cst_4 : f32 to vector<1x512xf32>
    %14 = arith.maximumf %12, %13 : vector<1x512xf32>
    %c15 = arith.constant 15 : index
    %15 = memref.load %arg1[%c15] : memref<21xf32, #tpu.memory_space<smem>>
    %16 = vector.broadcast %15 : f32 to vector<1x512xf32>
    %17 = arith.mulf %14, %16 : vector<1x512xf32>
    %18 = arith.addf %2, %17 : vector<1x512xf32>
    %c2 = arith.constant 2 : index
    %19 = memref.load %arg1[%c2] : memref<21xf32, #tpu.memory_space<smem>>
    %20 = vector.broadcast %19 : f32 to vector<1x512xf32>
    %21 = arith.mulf %0, %20 : vector<1x512xf32>
    %c3 = arith.constant 3 : index
    %22 = memref.load %arg1[%c3] : memref<21xf32, #tpu.memory_space<smem>>
    %23 = vector.broadcast %22 : f32 to vector<1x512xf32>
    %24 = arith.mulf %1, %23 : vector<1x512xf32>
    %25 = arith.addf %21, %24 : vector<1x512xf32>
    %c11 = arith.constant 11 : index
    %26 = memref.load %arg1[%c11] : memref<21xf32, #tpu.memory_space<smem>>
    %27 = vector.broadcast %26 : f32 to vector<1x512xf32>
    %28 = arith.addf %25, %27 : vector<1x512xf32>
    %cst_5 = arith.constant 0.000000e+00 : f32
    %29 = vector.broadcast %cst_5 : f32 to vector<1x512xf32>
    %30 = arith.maximumf %28, %29 : vector<1x512xf32>
    %c16 = arith.constant 16 : index
    %31 = memref.load %arg1[%c16] : memref<21xf32, #tpu.memory_space<smem>>
    %32 = vector.broadcast %31 : f32 to vector<1x512xf32>
    %33 = arith.mulf %30, %32 : vector<1x512xf32>
    %34 = arith.addf %18, %33 : vector<1x512xf32>
    %c4 = arith.constant 4 : index
    %35 = memref.load %arg1[%c4] : memref<21xf32, #tpu.memory_space<smem>>
    %36 = vector.broadcast %35 : f32 to vector<1x512xf32>
    %37 = arith.mulf %0, %36 : vector<1x512xf32>
    %c5 = arith.constant 5 : index
    %38 = memref.load %arg1[%c5] : memref<21xf32, #tpu.memory_space<smem>>
    %39 = vector.broadcast %38 : f32 to vector<1x512xf32>
    %40 = arith.mulf %1, %39 : vector<1x512xf32>
    %41 = arith.addf %37, %40 : vector<1x512xf32>
    %c12 = arith.constant 12 : index
    %42 = memref.load %arg1[%c12] : memref<21xf32, #tpu.memory_space<smem>>
    %43 = vector.broadcast %42 : f32 to vector<1x512xf32>
    %44 = arith.addf %41, %43 : vector<1x512xf32>
    %cst_6 = arith.constant 0.000000e+00 : f32
    %45 = vector.broadcast %cst_6 : f32 to vector<1x512xf32>
    %46 = arith.maximumf %44, %45 : vector<1x512xf32>
    %c17 = arith.constant 17 : index
    %47 = memref.load %arg1[%c17] : memref<21xf32, #tpu.memory_space<smem>>
    %48 = vector.broadcast %47 : f32 to vector<1x512xf32>
    %49 = arith.mulf %46, %48 : vector<1x512xf32>
    %50 = arith.addf %34, %49 : vector<1x512xf32>
    %c6 = arith.constant 6 : index
    %51 = memref.load %arg1[%c6] : memref<21xf32, #tpu.memory_space<smem>>
    %52 = vector.broadcast %51 : f32 to vector<1x512xf32>
    %53 = arith.mulf %0, %52 : vector<1x512xf32>
    %c7 = arith.constant 7 : index
    %54 = memref.load %arg1[%c7] : memref<21xf32, #tpu.memory_space<smem>>
    %55 = vector.broadcast %54 : f32 to vector<1x512xf32>
    %56 = arith.mulf %1, %55 : vector<1x512xf32>
    %57 = arith.addf %53, %56 : vector<1x512xf32>
    %c13 = arith.constant 13 : index
    %58 = memref.load %arg1[%c13] : memref<21xf32, #tpu.memory_space<smem>>
    %59 = vector.broadcast %58 : f32 to vector<1x512xf32>
    %60 = arith.addf %57, %59 : vector<1x512xf32>
    %cst_7 = arith.constant 0.000000e+00 : f32
    %61 = vector.broadcast %cst_7 : f32 to vector<1x512xf32>
    %62 = arith.maximumf %60, %61 : vector<1x512xf32>
    %c18 = arith.constant 18 : index
    %63 = memref.load %arg1[%c18] : memref<21xf32, #tpu.memory_space<smem>>
    %64 = vector.broadcast %63 : f32 to vector<1x512xf32>
    %65 = arith.mulf %62, %64 : vector<1x512xf32>
    %66 = arith.addf %50, %65 : vector<1x512xf32>
    %c8 = arith.constant 8 : index
    %67 = memref.load %arg1[%c8] : memref<21xf32, #tpu.memory_space<smem>>
    %68 = vector.broadcast %67 : f32 to vector<1x512xf32>
    %69 = arith.mulf %0, %68 : vector<1x512xf32>
    %c9 = arith.constant 9 : index
    %70 = memref.load %arg1[%c9] : memref<21xf32, #tpu.memory_space<smem>>
    %71 = vector.broadcast %70 : f32 to vector<1x512xf32>
    %72 = arith.mulf %1, %71 : vector<1x512xf32>
    %73 = arith.addf %69, %72 : vector<1x512xf32>
    %c14 = arith.constant 14 : index
    %74 = memref.load %arg1[%c14] : memref<21xf32, #tpu.memory_space<smem>>
    %75 = vector.broadcast %74 : f32 to vector<1x512xf32>
    %76 = arith.addf %73, %75 : vector<1x512xf32>
    %cst_8 = arith.constant 0.000000e+00 : f32
    %77 = vector.broadcast %cst_8 : f32 to vector<1x512xf32>
    %78 = arith.maximumf %76, %77 : vector<1x512xf32>
    %c19 = arith.constant 19 : index
    %79 = memref.load %arg1[%c19] : memref<21xf32, #tpu.memory_space<smem>>
    %80 = vector.broadcast %79 : f32 to vector<1x512xf32>
    %81 = arith.mulf %78, %80 : vector<1x512xf32>
    %82 = arith.addf %66, %81 : vector<1x512xf32>
    %c20 = arith.constant 20 : index
    %83 = memref.load %arg1[%c20] : memref<21xf32, #tpu.memory_space<smem>>
    %84 = vector.broadcast %83 : f32 to vector<1x512xf32>
    %85 = arith.addf %82, %84 : vector<1x512xf32>
    %cst_9 = arith.constant 0.000000e+00 : f32
    %86 = vector.broadcast %cst_9 : f32 to vector<1x512xf32>
    %87 = arith.subf %86, %85 : vector<1x512xf32>
    %88 = math.exp %87 : vector<1x512xf32>
    %cst_10 = arith.constant 1.000000e+00 : f32
    %89 = vector.broadcast %cst_10 : f32 to vector<1x512xf32>
    %90 = arith.addf %89, %88 : vector<1x512xf32>
    %cst_11 = arith.constant 1.000000e+00 : f32
    %91 = vector.broadcast %cst_11 : f32 to vector<1x512xf32>
    %92 = arith.divf %91, %90 : vector<1x512xf32>
    %c0_12 = arith.constant 0 : index
    %c0_13 = arith.constant 0 : index
    %93 = vector.load %arg3[%c0_12, %c0_13] : memref<1x512xf32, #tpu.memory_space<vmem>>, vector<1x512xf32>
    tpu.vector_store %arg3[%c0_12, %c0_13], %92 {strides = array<i32>} : memref<1x512xf32, #tpu.memory_space<vmem>>, vector<1x512xf32>,
    return
  }
  func.func @transform_0(%arg0: i32) -> i32 {
    %c0_i32 = arith.constant 0 : i32
    %c0_i32_0 = arith.constant 0 : i32
    return %c0_i32 : i32
  }
  func.func @transform_1(%arg0: i32) -> (i32, i32) {
    %c0_i32 = arith.constant 0 : i32
    %c0_i32_0 = arith.constant 0 : i32
    return %c0_i32, %arg0 : i32, i32
  }
  func.func @transform_2(%arg0: i32) -> (i32, i32) {
    %c0_i32 = arith.constant 0 : i32
    %c0_i32_0 = arith.constant 0 : i32
    return %c0_i32, %arg0 : i32, i32
  }
}

</mosaic_0001>

<llo_original>
// kernel: tpu_custom_call.1
$region0: #{tpu_custom_call.1}
  #allocation0 [shape = 'u32[]', space=smem, size = 0x4, offset = 0x4, fixed_abs, tag = 'smem constant byte address 0x4 - core index']
  #allocation1 [shape = 'u32[144,128]{1,0:T(1,128)}', space=vmem, size = 0x12000, scoped, tag = 'internal scratch']
  %s0 = inlined_call_operand.hbm [shape: f32[21], index: 0, kind: input, shape index: {}]
  %s1 = inlined_call_operand.hbm [shape: f32[2,512], index: 1, kind: input, shape index: {}]
  %s2 = inlined_call_operand.hbm [shape: f32[1,512], index: 2, kind: output, shape index: {}]
  %s3 = sld [smem:[#allocation0]]
  $region26: #{tpu_custom_call.1} parent=0
    _
  %s5 = ssub.s32 1, %s3
  %s6 = scalar_select 0, %s5, %s3
  $region1: #{tpu_custom_call.1} parent=0
    #allocation2 [shape = 'u8[512]{0}', space=smem, size = 0x200, scoped, tag = 'input window, operand 0, single buffered']
    #allocation3 [shape = 's32[1]{0}', space=sflag, size = 0x4, scoped, tag = 'scoped memory for tpu_custom_call.1']
    #allocation4 [shape = 's32[1]{0}', space=sflag, size = 0x4, scoped, tag = 'scoped memory for tpu_custom_call.1']
    #allocation5 [shape = 's32[1]{0}', space=sflag, size = 0x4, scoped, tag = 'scoped memory for tpu_custom_call.1']
    #allocation6 [shape = 'u8[4096]{0}', space=vmem, size = 0x1000, scoped, tag = 'input window, operand 1, single buffered']
    #allocation7 [shape = 'u8[2048]{0}', space=vmem, size = 0x800, scoped, tag = 'output window, operand 0, single buffered']
    %7 = vsyncpa [#allocation5], 0
    %8 = vsyncpa [#allocation3], 0
    %9 = vsyncpa [#allocation4], 0
    // Predicated region
    $region2: #{tpu_custom_call.1} parent=1 // pred_check
      _
    $region3: #{tpu_custom_call.1} parent=1 // pred_check_branch
      %11 = sbr.rel (0) target = $region5
    $region4: #{tpu_custom_call.1} parent=1 // pred_region
      %s13 = ssub.s32 16, 16
      %14 = vsyncadd [#allocation5], %s13
      %17 = dma.hbm_to_smem %s0, 16, [#allocation2], [#allocation5]
    $region5: #{tpu_custom_call.1} parent=1 // pred_fallthru
      _
    // Predicated region
    $region6: #{tpu_custom_call.1} parent=1 // pred_check
      _
    $region7: #{tpu_custom_call.1} parent=1 // pred_check_branch
      %19 = sbr.rel (0) target = $region9
    $region8: #{tpu_custom_call.1} parent=1 // pred_region
      %s21 = ssub.s32 128, 128
      %22 = vsyncadd [#allocation3], %s21
      %s24 = sshll.u32 [#allocation6], 4
      %s25 = int_to_ptr.vmem [resolvable:$true] %s24
      %27 = dma.hbm_to_vmem [thread:$0]  %s1, 128, %s25, [#allocation3]
    $region9: #{tpu_custom_call.1} parent=1 // pred_fallthru
      _
    // Predicated region
    $region10: #{tpu_custom_call.1} parent=1 // pred_check
      _
    $region11: #{tpu_custom_call.1} parent=1 // pred_check_branch
      %29 = sbr.rel (0) target = $region13
    $region12: #{tpu_custom_call.1} parent=1 // pred_region
      %30 = dma.done [#allocation5], 16
    $region13: #{tpu_custom_call.1} parent=1 // pred_fallthru
      _
    // Predicated region
    $region14: #{tpu_custom_call.1} parent=1 // pred_check
      _
    $region15: #{tpu_custom_call.1} parent=1 // pred_check_branch
      %32 = sbr.rel (0) target = $region17
    $region16: #{tpu_custom_call.1} parent=1 // pred_region
      %33 = dma.done [#allocation3], 128
    $region17: #{tpu_custom_call.1} parent=1 // pred_fallthru
      _
    %34 = sfence
    %v35 = vld [vmem:[#allocation6] ss:$2 sm:$0xf]
    %s36 = scalar_lea.vmem [#allocation6], 1
    %v37 = vld [vmem:[%s36] ss:$2 sm:$0xf]
    %s38 = sld [smem:[#allocation2]]
    %v39 = vstv %s38
    %v40 = vmul.f32 %v35, %v39
    %s41 = sld [smem:[#allocation2 + $0x1]]
    %v42 = vstv %s41
    %v43 = vmul.f32 %v37, %v42
    %v44 = vadd.f32 %v40, %v43
    %s45 = sld [smem:[#allocation2 + $0xa]]
    %v46 = vstv %s45
    %v47 = vadd.f32 %v44, %v46
    %v48 = vmax.f32 %v47, 0.0
    %s49 = sld [smem:[#allocation2 + $0xf]]
    %v50 = vstv %s49
    %v51 = vmul.f32 %v48, %v50
    %v52 = vadd.f32 %v51, 0.0
    %s53 = sld [smem:[#allocation2 + $0x2]]
    %v54 = vstv %s53
    %v55 = vmul.f32 %v35, %v54
    %s56 = sld [smem:[#allocation2 + $0x3]]
    %v57 = vstv %s56
    %v58 = vmul.f32 %v37, %v57
    %v59 = vadd.f32 %v55, %v58
    %s60 = sld [smem:[#allocation2 + $0xb]]
    %v61 = vstv %s60
    %v62 = vadd.f32 %v59, %v61
    %v63 = vmax.f32 %v62, 0.0
    %s64 = sld [smem:[#allocation2 + $0x10]]
    %v65 = vstv %s64
    %v66 = vmul.f32 %v63, %v65
    %v67 = vadd.f32 %v52, %v66
    %s68 = sld [smem:[#allocation2 + $0x4]]
    %v69 = vstv %s68
    %v70 = vmul.f32 %v35, %v69
    %s71 = sld [smem:[#allocation2 + $0x5]]
    %v72 = vstv %s71
    %v73 = vmul.f32 %v37, %v72
    %v74 = vadd.f32 %v70, %v73
    %s75 = sld [smem:[#allocation2 + $0xc]]
    %v76 = vstv %s75
    %v77 = vadd.f32 %v74, %v76
    %v78 = vmax.f32 %v77, 0.0
    %s79 = sld [smem:[#allocation2 + $0x11]]
    %v80 = vstv %s79
    %v81 = vmul.f32 %v78, %v80
    %v82 = vadd.f32 %v67, %v81
    %s83 = sld [smem:[#allocation2 + $0x6]]
    %v84 = vstv %s83
    %v85 = vmul.f32 %v35, %v84
    %s86 = sld [smem:[#allocation2 + $0x7]]
    %v87 = vstv %s86
    %v88 = vmul.f32 %v37, %v87
    %v89 = vadd.f32 %v85, %v88
    %s90 = sld [smem:[#allocation2 + $0xd]]
    %v91 = vstv %s90
    %v92 = vadd.f32 %v89, %v91
    %v93 = vmax.f32 %v92, 0.0
    %s94 = sld [smem:[#allocation2 + $0x12]]
    %v95 = vstv %s94
    %v96 = vmul.f32 %v93, %v95
    %v97 = vadd.f32 %v82, %v96
    %s98 = sld [smem:[#allocation2 + $0x8]]
    %v99 = vstv %s98
    %v100 = vmul.f32 %v35, %v99
    %s101 = sld [smem:[#allocation2 + $0x9]]
    %v102 = vstv %s101
    %v103 = vmul.f32 %v37, %v102
    %v104 = vadd.f32 %v100, %v103
    %s105 = sld [smem:[#allocation2 + $0xe]]
    %v106 = vstv %s105
    %v107 = vadd.f32 %v104, %v106
    %v108 = vmax.f32 %v107, 0.0
    %s109 = sld [smem:[#allocation2 + $0x13]]
    %v110 = vstv %s109
    %v111 = vmul.f32 %v108, %v110
    %v112 = vadd.f32 %v97, %v111
    %s113 = sld [smem:[#allocation2 + $0x14]]
    %v114 = vstv %s113
    %v115 = vadd.f32 %v112, %v114
    %v116 = vsub.f32 0.0, %v115
    %v117 = vmul.f32 %v116, 1.442695
    %v118 = vpow.pop %v117
    %v119 = vadd.f32 %v118, 1.0
    %v120 = vrcp.pop %v119
    %v121 = vmul.f32 1.0, %v120
    %v122 = vlaneseq
    %vm123 = vcmp.ge.s32.totalorder %v122, 0
    %vm124 = vcmp.lt.s32.totalorder %v122, 512
    %vm125 = vmand %vm123, %vm124
    %126 = vst.msk [vmem:[#allocation7] sm:$0xf] %vm125, %v121
    // Predicated region
    $region18: #{tpu_custom_call.1} parent=1 // pred_check
      _
    $region19: #{tpu_custom_call.1} parent=1 // pred_check_branch
      %128 = sbr.rel (0) target = $region21
    $region20: #{tpu_custom_call.1} parent=1 // pred_region
      %s130 = ssub.s32 64, 64
      %131 = vsyncadd [#allocation4], %s130
      %s133 = sshll.u32 [#allocation7], 4
      %s134 = int_to_ptr.vmem [resolvable:$true] %s133
      %136 = dma.vmem_to_hbm [thread:$0]  %s134, 64, %s2, [#allocation4]
    $region21: #{tpu_custom_call.1} parent=1 // pred_fallthru
      _
    // Predicated region
    $region22: #{tpu_custom_call.1} parent=1 // pred_check
      _
    $region23: #{tpu_custom_call.1} parent=1 // pred_check_branch
      %138 = sbr.rel (0) target = $region25
    $region24: #{tpu_custom_call.1} parent=1 // pred_region
      %139 = dma.done [#allocation4], 64
    $region25: #{tpu_custom_call.1} parent=1 // pred_fallthru
      _
    %140 = vsyncpa [#allocation3], 1
    %141 = vsyncpa [#allocation4], 1
    %142 = vsyncpa [#allocation5], 1

</llo_original>
